<compile_context>
chip_gen: v7x
topology: tpu7x:2x2x1
jax: 0.10.0
libtpu: 0.0.40
codegen_flags: <defaults>
</compile_context>

<pallas_src>
import functools

import jax
import jax.numpy as jnp
from jax.experimental import pallas as pl
from jax.experimental.pallas import tpu as pltpu


def _compute_embedding_size(n_categories):
    val = min(600, round(1.6 * n_categories ** 0.56))
    return int(val)


def _round_up(x, m):
    return (x + m - 1) // m * m


# ------------------------- Pallas kernel -------------------------

def ae_forward_kernel(
    x_ref,            # (TM, 2*D_in)   f32  -- two logical rows packed per row
    mask_ref,         # (1, 2*N_tot)   int32: 1 on binary (sigmoid) columns
    w1_ref, b1_ref,   # (2*D_in, 2*D1) bf16 / (1, 2*D1) f32  [block-diagonal]
    w2_ref, b2_ref,
    w3_ref, b3_ref,
    wh_ref, bh_ref,   # fused output heads (numeric|binary|cat0|cat1), block-diag
    out_ref,          # (TM, 2*N_tot)  bf16 (default)
):
    # In-kernel f32 -> bf16 cast (VPU work hidden under MXU slack); avoids a
    # separate wrapper-side HBM pass over x.
    xb = x_ref[...].astype(jnp.bfloat16)

    # Encoder: 3 x (Linear + relu).  Decoder is empty (default config).
    # Two logical rows per physical row via block-diagonal weights ->
    # 128-lane-dense activations.  bf16 MXU operands, f32 epilogue.
    h = jnp.dot(xb, w1_ref[...], preferred_element_type=jnp.float32)
    h = jnp.maximum(h + b1_ref[...], 0.0)
    h = jnp.dot(h.astype(jnp.bfloat16), w2_ref[...],
                preferred_element_type=jnp.float32)
    h = jnp.maximum(h + b2_ref[...], 0.0)
    h = jnp.dot(h.astype(jnp.bfloat16), w3_ref[...],
                preferred_element_type=jnp.float32)
    h = jnp.maximum(h + b3_ref[...], 0.0)

    # All output heads fused into one matmul + one store.
    y = jnp.dot(h.astype(jnp.bfloat16), wh_ref[...],
                preferred_element_type=jnp.float32) + bh_ref[...]

    # Numerically stable sigmoid on the binary columns only:
    # sigmoid(x) = 0.5 * tanh(x/2) + 0.5  (single EUP op, no overflow).
    sig = 0.5 * jnp.tanh(0.5 * y) + 0.5
    out_ref[...] = jnp.where(mask_ref[...] != 0, sig, y).astype(out_ref.dtype)


# ------------------------- wrapper -------------------------

def _block_diag2(w):
    """(d_in, d_out) -> (2*d_in, 2*d_out) block-diagonal diag(w, w)."""
    d_in, d_out = w.shape
    z = jnp.zeros((d_in, d_out), w.dtype)
    return jnp.concatenate(
        [jnp.concatenate([w, z], axis=1),
         jnp.concatenate([z, w], axis=1)], axis=0)


@functools.partial(jax.jit, static_argnames=("tile_m", "out_dtype"))
def ae_forward(x, params, *, tile_m=2048, out_dtype=jnp.bfloat16):
    (w1, b1, w2, b2, w3, b3, wn, bn, wb, bb, wc0, bc0, wc1, bc1) = params
    B, d_in = x.shape
    n_num, n_bin = wn.shape[1], wb.shape[1]
    n_c0, n_c1 = wc0.shape[1], wc1.shape[1]
    n_tot = n_num + n_bin + n_c0 + n_c1
    d1, d2, d3 = w1.shape[1], w2.shape[1], w3.shape[1]

    # Fuse the four output heads into one weight / bias.
    wh = jnp.concatenate([wn, wb, wc0, wc1], axis=1)
    bh = jnp.concatenate([bn, bb, bc0, bc1], axis=1)

    # 2-row lane packing: x (B, d_in) -> (Bp, 2*d_in); weights -> diag(W, W).
    if B % 2:                      # one zero row only when the batch is odd
        x = jnp.pad(x, ((0, 1), (0, 0)))
    Bp = x.shape[0] // 2
    xp = x.reshape(Bp, 2 * d_in)   # contiguous row-major -> free reshape

    w1b, w2b, w3b, whb = (
        _block_diag2(w).astype(jnp.bfloat16) for w in (w1, w2, w3, wh))
    b1f, b2f, b3f, bhf = (
        jnp.concatenate([b, b], axis=1).astype(jnp.float32)
        for b in (b1, b2, b3, bh))

    # Loop-invariant binary-column mask, hoisted out of the kernel.
    cmod = jnp.arange(2 * n_tot, dtype=jnp.int32) % n_tot
    bin_mask = ((cmod >= n_num) & (cmod < n_num + n_bin)).astype(
        jnp.int32).reshape(1, 2 * n_tot)

    # Batch tiling: large tiles amortize the ~0.35us grid-step overhead
    # (per-tile VMEM is tiny: ~tm*(32*4 + 48*2) bytes), but keep >=2 grid
    # steps when the batch allows so v7x's 2 TensorCores both get work.
    # Ragged last tile handled by the cdiv grid (no batch padding).
    tm = min(tile_m, _round_up(Bp, 8))
    if Bp > 8 and pl.cdiv(Bp, tm) < 2:
        tm = _round_up(pl.cdiv(Bp, 2), 8)
    grid = (pl.cdiv(Bp, tm),)

    def _pinned(shape):
        return pl.BlockSpec(shape, lambda i: (0, 0))

    flops = 2 * Bp * ((2 * d_in) * (2 * d1) + (2 * d1) * (2 * d2)
                      + (2 * d2) * (2 * d3) + (2 * d3) * (2 * n_tot))
    bytes_accessed = (
        xp.size * 4
        + sum(a.size * 2 for a in (w1b, w2b, w3b, whb))
        + sum(a.size * 4 for a in (b1f, b2f, b3f, bhf))
        + bin_mask.size * 4
        + Bp * 2 * n_tot * jnp.dtype(out_dtype).itemsize)

    out = pl.pallas_call(
        ae_forward_kernel,
        out_shape=jax.ShapeDtypeStruct((Bp, 2 * n_tot), out_dtype),
        grid=grid,
        in_specs=[
            pl.BlockSpec((tm, 2 * d_in), lambda i: (i, 0)),
            _pinned(bin_mask.shape),
            _pinned(w1b.shape), _pinned(b1f.shape),
            _pinned(w2b.shape), _pinned(b2f.shape),
            _pinned(w3b.shape), _pinned(b3f.shape),
            _pinned(whb.shape), _pinned(bhf.shape),
        ],
        out_specs=pl.BlockSpec((tm, 2 * n_tot), lambda i: (i, 0)),
        compiler_params=pltpu.CompilerParams(
            dimension_semantics=("parallel",),
        ),
        cost_estimate=pl.CostEstimate(
            flops=flops,
            transcendentals=Bp * 2 * n_tot,
            bytes_accessed=bytes_accessed,
        ),
    )(xp, bin_mask, w1b, b1f, w2b, b2f, w3b, b3f, whb, bhf)

    # De-interleave the 2-row pack, drop the pad row, split fused head cols.
    out = out.reshape(2 * Bp, n_tot)[:B]
    num = out[:, :n_num]
    binv = out[:, n_num:n_num + n_bin]
    cat0 = out[:, n_num + n_bin:n_num + n_bin + n_c0]
    cat1 = out[:, n_num + n_bin + n_c0:]
    return num, binv, cat0, cat1


# ------------------------- parameter construction -------------------------

def build_params(key, input_dim, enc_dims, n_num, n_bin, cat_sizes):
    """Deterministic synthetic parameters (shapes match AEModule.build)."""

    def linear(key, d_in, d_out):
        kw, kb = jax.random.split(key)
        bound = 1.0 / jnp.sqrt(jnp.float32(d_in))
        w = jax.random.uniform(kw, (d_in, d_out), jnp.float32, -bound, bound)
        b = jax.random.uniform(kb, (1, d_out), jnp.float32, -bound, bound)
        return w, b

    keys = jax.random.split(key, 6 + len(cat_sizes))
    dims = [input_dim] + list(enc_dims)
    params = []
    for i in range(len(enc_dims)):
        params += list(linear(keys[i], dims[i], dims[i + 1]))
    d = dims[-1]
    params += list(linear(keys[3], d, n_num))          # numeric_output
    params += list(linear(keys[4], d, n_bin))          # binary_output
    for j, n_cat in enumerate(cat_sizes):
        params += list(linear(keys[5 + j], d, n_cat))  # categorical_output[ft]
    return tuple(params)


def reference_forward(x, params):
    """Pure-JAX f32 reference matching AEModule.forward semantics."""
    (w1, b1, w2, b2, w3, b3, wn, bn, wb, bb, wc0, bc0, wc1, bc1) = params
    h = jnp.maximum(x @ w1 + b1, 0.0)
    h = jnp.maximum(h @ w2 + b2, 0.0)
    h = jnp.maximum(h @ w3 + b3, 0.0)
    num = h @ wn + bn
    binv = jax.nn.sigmoid(h @ wb + bb)
    c0 = h @ wc0 + bc0
    c1 = h @ wc1 + bc1
    return num, binv, c0, c1


# ------------------------- main -------------------------

if __name__ == "__main__":
    # Feature configuration.
    n_num_fts = 3
    n_bin_fts = 2
    cat_counts = [6, 11]                          # raw category counts
    n_cats = [c + 1 for c in cat_counts]          # +1 like AEModule (=7, 12)
    embed_dims = [_compute_embedding_size(n) for n in n_cats]  # [5, 6]

    input_dim = sum(embed_dims) + n_num_fts + n_bin_fts       # 16
    enc_dims = [4 * input_dim] * 3                             # [64, 64, 64]

    key = jax.random.PRNGKey(0)
    k_x, k_p = jax.random.split(key)
    params = build_params(k_p, input_dim, enc_dims, n_num_fts, n_bin_fts, n_cats)

    def check(outs, x, batch):
        rnum, rbin, rc0, rc1 = reference_forward(x, params)
        num, binv, cat0, cat1 = outs
        assert num.shape == (batch, n_num_fts)
        assert binv.shape == (batch, n_bin_fts)
        assert cat0.shape == (batch, n_cats[0])
        assert cat1.shape == (batch, n_cats[1])
        # bf16 matmul operands / outputs => loose tolerance vs f32 reference.
        for a, b in ((num, rnum), (binv, rbin), (cat0, rc0), (cat1, rc1)):
            assert jnp.allclose(a.astype(jnp.float32), b, atol=5e-2, rtol=5e-2)

    # 1) even batch: 2 grid steps (Bp=10 packed rows -> tm=8, grid=2), bf16 out.
    x20 = jax.random.normal(k_x, (20, input_dim), jnp.float32)
    outs = ae_forward(x20, params)
    jax.block_until_ready(outs)
    check(outs, x20, 20)

    # 2) odd batch (exercises the single-row pad before packing) with f32 out.
    x21 = jax.random.normal(jax.random.fold_in(k_x, 1), (21, input_dim),
                            jnp.float32)
    outs = ae_forward(x21, params, out_dtype=jnp.float32)
    jax.block_until_ready(outs)
    check(outs, x21, 21)

    # TODO(synk): dropout layers (train-mode only) are identity in eval and omitted.
    print("KERNEL_OK")
</pallas_src>

<mosaic_0001>
module attributes {stable_mosaic.version = 11 : i64} {
  func.func @ae_forward_kernel(%arg0: i32, %arg1: memref<8x32xf32, #tpu.memory_space<vmem>>, %arg2: memref<1x48xi32, #tpu.memory_space<vmem>>, %arg3: memref<32x128xbf16, #tpu.memory_space<vmem>>, %arg4: memref<1x128xf32, #tpu.memory_space<vmem>>, %arg5: memref<128x128xbf16, #tpu.memory_space<vmem>>, %arg6: memref<1x128xf32, #tpu.memory_space<vmem>>, %arg7: memref<128x128xbf16, #tpu.memory_space<vmem>>, %arg8: memref<1x128xf32, #tpu.memory_space<vmem>>, %arg9: memref<128x48xbf16, #tpu.memory_space<vmem>>, %arg10: memref<1x48xf32, #tpu.memory_space<vmem>>, %arg11: memref<8x48xbf16, #tpu.memory_space<vmem>>) attributes {dimension_semantics = [#tpu.dimension_semantics<parallel>], iteration_bounds = array<i64: 2>, scalar_prefetch = 0 : i64, scratch_operands = 0 : i64, tpu.core_type = #tpu.core_type<tc>, window_params = [{transform_indices = @transform_0, window_bounds = array<i64: 8, 32>}, {pipeline_mode = #tpu.pipeline_mode<synchronous>, transform_indices = @transform_1, window_bounds = array<i64: 1, 48>}, {pipeline_mode = #tpu.pipeline_mode<synchronous>, transform_indices = @transform_2, window_bounds = array<i64: 32, 128>}, {pipeline_mode = #tpu.pipeline_mode<synchronous>, transform_indices = @transform_3, window_bounds = array<i64: 1, 128>}, {pipeline_mode = #tpu.pipeline_mode<synchronous>, transform_indices = @transform_4, window_bounds = array<i64: 128, 128>}, {pipeline_mode = #tpu.pipeline_mode<synchronous>, transform_indices = @transform_5, window_bounds = array<i64: 1, 128>}, {pipeline_mode = #tpu.pipeline_mode<synchronous>, transform_indices = @transform_6, window_bounds = array<i64: 128, 128>}, {pipeline_mode = #tpu.pipeline_mode<synchronous>, transform_indices = @transform_7, window_bounds = array<i64: 1, 128>}, {pipeline_mode = #tpu.pipeline_mode<synchronous>, transform_indices = @transform_8, window_bounds = array<i64: 128, 48>}, {pipeline_mode = #tpu.pipeline_mode<synchronous>, transform_indices = @transform_9, window_bounds = array<i64: 1, 48>}, {transform_indices = @transform_10, window_bounds = array<i64: 8, 48>}]} {
    %c0 = arith.constant 0 : index
    %c0_0 = arith.constant 0 : index
    %0 = vector.load %arg1[%c0, %c0_0] : memref<8x32xf32, #tpu.memory_space<vmem>>, vector<8x32xf32>
    %1 = arith.truncf %0 : vector<8x32xf32> to vector<8x32xbf16>
    %c0_1 = arith.constant 0 : index
    %c0_2 = arith.constant 0 : index
    %2 = vector.load %arg3[%c0_1, %c0_2] : memref<32x128xbf16, #tpu.memory_space<vmem>>, vector<32x128xbf16>
    %cst = arith.constant dense<0.000000e+00> : vector<8x128xf32>
    %3 = tpu.matmul %1, %2, %cst {dimension_numbers = #tpu.dot_dimension_numbers<[1], [0], [0], [1], [0, 0, 1, 1], [], []>} : vector<8x32xbf16>, vector<32x128xbf16>, vector<8x128xf32> -> vector<8x128xf32>
    %c0_3 = arith.constant 0 : index
    %c0_4 = arith.constant 0 : index
    %4 = vector.load %arg4[%c0_3, %c0_4] : memref<1x128xf32, #tpu.memory_space<vmem>>, vector<1x128xf32>
    %5 = vector.broadcast %4 : vector<1x128xf32> to vector<8x128xf32>
    %6 = arith.addf %3, %5 : vector<8x128xf32>
    %cst_5 = arith.constant 0.000000e+00 : f32
    %7 = vector.broadcast %cst_5 : f32 to vector<8x128xf32>
    %8 = arith.maximumf %6, %7 : vector<8x128xf32>
    %9 = arith.truncf %8 : vector<8x128xf32> to vector<8x128xbf16>
    %c0_6 = arith.constant 0 : index
    %c0_7 = arith.constant 0 : index
    %10 = vector.load %arg5[%c0_6, %c0_7] : memref<128x128xbf16, #tpu.memory_space<vmem>>, vector<128x128xbf16>
    %cst_8 = arith.constant dense<0.000000e+00> : vector<8x128xf32>
    %11 = tpu.matmul %9, %10, %cst_8 {dimension_numbers = #tpu.dot_dimension_numbers<[1], [0], [0], [1], [0, 0, 1, 1], [], []>} : vector<8x128xbf16>, vector<128x128xbf16>, vector<8x128xf32> -> vector<8x128xf32>
    %c0_9 = arith.constant 0 : index
    %c0_10 = arith.constant 0 : index
    %12 = vector.load %arg6[%c0_9, %c0_10] : memref<1x128xf32, #tpu.memory_space<vmem>>, vector<1x128xf32>
    %13 = vector.broadcast %12 : vector<1x128xf32> to vector<8x128xf32>
    %14 = arith.addf %11, %13 : vector<8x128xf32>
    %cst_11 = arith.constant 0.000000e+00 : f32
    %15 = vector.broadcast %cst_11 : f32 to vector<8x128xf32>
    %16 = arith.maximumf %14, %15 : vector<8x128xf32>
    %17 = arith.truncf %16 : vector<8x128xf32> to vector<8x128xbf16>
    %c0_12 = arith.constant 0 : index
    %c0_13 = arith.constant 0 : index
    %18 = vector.load %arg7[%c0_12, %c0_13] : memref<128x128xbf16, #tpu.memory_space<vmem>>, vector<128x128xbf16>
    %cst_14 = arith.constant dense<0.000000e+00> : vector<8x128xf32>
    %19 = tpu.matmul %17, %18, %cst_14 {dimension_numbers = #tpu.dot_dimension_numbers<[1], [0], [0], [1], [0, 0, 1, 1], [], []>} : vector<8x128xbf16>, vector<128x128xbf16>, vector<8x128xf32> -> vector<8x128xf32>
    %c0_15 = arith.constant 0 : index
    %c0_16 = arith.constant 0 : index
    %20 = vector.load %arg8[%c0_15, %c0_16] : memref<1x128xf32, #tpu.memory_space<vmem>>, vector<1x128xf32>
    %21 = vector.broadcast %20 : vector<1x128xf32> to vector<8x128xf32>
    %22 = arith.addf %19, %21 : vector<8x128xf32>
    %cst_17 = arith.constant 0.000000e+00 : f32
    %23 = vector.broadcast %cst_17 : f32 to vector<8x128xf32>
    %24 = arith.maximumf %22, %23 : vector<8x128xf32>
    %25 = arith.truncf %24 : vector<8x128xf32> to vector<8x128xbf16>
    %c0_18 = arith.constant 0 : index
    %c0_19 = arith.constant 0 : index
    %26 = vector.load %arg9[%c0_18, %c0_19] : memref<128x48xbf16, #tpu.memory_space<vmem>>, vector<128x48xbf16>
    %cst_20 = arith.constant dense<0.000000e+00> : vector<8x48xf32>
    %27 = tpu.matmul %25, %26, %cst_20 {dimension_numbers = #tpu.dot_dimension_numbers<[1], [0], [0], [1], [0, 0, 1, 1], [], []>} : vector<8x128xbf16>, vector<128x48xbf16>, vector<8x48xf32> -> vector<8x48xf32>
    %c0_21 = arith.constant 0 : index
    %c0_22 = arith.constant 0 : index
    %28 = vector.load %arg10[%c0_21, %c0_22] : memref<1x48xf32, #tpu.memory_space<vmem>>, vector<1x48xf32>
    %29 = vector.broadcast %28 : vector<1x48xf32> to vector<8x48xf32>
    %30 = arith.addf %27, %29 : vector<8x48xf32>
    %cst_23 = arith.constant 5.000000e-01 : f32
    %31 = vector.broadcast %cst_23 : f32 to vector<8x48xf32>
    %32 = arith.mulf %31, %30 : vector<8x48xf32>
    %33 = math.tanh %32 : vector<8x48xf32>
    %cst_24 = arith.constant 5.000000e-01 : f32
    %34 = vector.broadcast %cst_24 : f32 to vector<8x48xf32>
    %35 = arith.mulf %34, %33 : vector<8x48xf32>
    %cst_25 = arith.constant 5.000000e-01 : f32
    %36 = vector.broadcast %cst_25 : f32 to vector<8x48xf32>
    %37 = arith.addf %35, %36 : vector<8x48xf32>
    %c0_26 = arith.constant 0 : index
    %c0_27 = arith.constant 0 : index
    %38 = vector.load %arg2[%c0_26, %c0_27] : memref<1x48xi32, #tpu.memory_space<vmem>>, vector<1x48xi32>
    %c0_i32 = arith.constant 0 : i32
    %39 = vector.broadcast %c0_i32 : i32 to vector<1x48xi32>
    %40 = arith.cmpi ne, %38, %39 : vector<1x48xi32>
    %41 = vector.shape_cast %40 : vector<1x48xi1> to vector<1x48xi1>
    %42 = vector.broadcast %41 : vector<1x48xi1> to vector<8x48xi1>
    %43 = arith.select %42, %37, %30 : vector<8x48xi1>, vector<8x48xf32>
    %44 = arith.truncf %43 : vector<8x48xf32> to vector<8x48xbf16>
    %c0_28 = arith.constant 0 : index
    %c0_29 = arith.constant 0 : index
    %45 = vector.load %arg11[%c0_28, %c0_29] : memref<8x48xbf16, #tpu.memory_space<vmem>>, vector<8x48xbf16>
    tpu.vector_store %arg11[%c0_28, %c0_29], %44 {strides = array<i32>} : memref<8x48xbf16, #tpu.memory_space<vmem>>, vector<8x48xbf16>,
    return
  }
  func.func @transform_0(%arg0: i32) -> (i32, i32) {
    %c0_i32 = arith.constant 0 : i32
    %c0_i32_0 = arith.constant 0 : i32
    return %arg0, %c0_i32 : i32, i32
  }
  func.func @transform_1(%arg0: i32) -> (i32, i32) {
    %c0_i32 = arith.constant 0 : i32
    %c0_i32_0 = arith.constant 0 : i32
    %c0_i32_1 = arith.constant 0 : i32
    return %c0_i32, %c0_i32_0 : i32, i32
  }
  func.func @transform_2(%arg0: i32) -> (i32, i32) {
    %c0_i32 = arith.constant 0 : i32
    %c0_i32_0 = arith.constant 0 : i32
    %c0_i32_1 = arith.constant 0 : i32
    return %c0_i32, %c0_i32_0 : i32, i32
  }
  func.func @transform_3(%arg0: i32) -> (i32, i32) {
    %c0_i32 = arith.constant 0 : i32
    %c0_i32_0 = arith.constant 0 : i32
    %c0_i32_1 = arith.constant 0 : i32
    return %c0_i32, %c0_i32_0 : i32, i32
  }
  func.func @transform_4(%arg0: i32) -> (i32, i32) {
    %c0_i32 = arith.constant 0 : i32
    %c0_i32_0 = arith.constant 0 : i32
    %c0_i32_1 = arith.constant 0 : i32
    return %c0_i32, %c0_i32_0 : i32, i32
  }
  func.func @transform_5(%arg0: i32) -> (i32, i32) {
    %c0_i32 = arith.constant 0 : i32
    %c0_i32_0 = arith.constant 0 : i32
    %c0_i32_1 = arith.constant 0 : i32
    return %c0_i32, %c0_i32_0 : i32, i32
  }
  func.func @transform_6(%arg0: i32) -> (i32, i32) {
    %c0_i32 = arith.constant 0 : i32
    %c0_i32_0 = arith.constant 0 : i32
    %c0_i32_1 = arith.constant 0 : i32
    return %c0_i32, %c0_i32_0 : i32, i32
  }
  func.func @transform_7(%arg0: i32) -> (i32, i32) {
    %c0_i32 = arith.constant 0 : i32
    %c0_i32_0 = arith.constant 0 : i32
    %c0_i32_1 = arith.constant 0 : i32
    return %c0_i32, %c0_i32_0 : i32, i32
  }
  func.func @transform_8(%arg0: i32) -> (i32, i32) {
    %c0_i32 = arith.constant 0 : i32
    %c0_i32_0 = arith.constant 0 : i32
    %c0_i32_1 = arith.constant 0 : i32
    return %c0_i32, %c0_i32_0 : i32, i32
  }
  func.func @transform_9(%arg0: i32) -> (i32, i32) {
    %c0_i32 = arith.constant 0 : i32
    %c0_i32_0 = arith.constant 0 : i32
    %c0_i32_1 = arith.constant 0 : i32
    return %c0_i32, %c0_i32_0 : i32, i32
  }
  func.func @transform_10(%arg0: i32) -> (i32, i32) {
    %c0_i32 = arith.constant 0 : i32
    %c0_i32_0 = arith.constant 0 : i32
    return %arg0, %c0_i32 : i32, i32
  }
}

</mosaic_0001>

<llo_original>
// kernel: ae_forward.1
$region0: #{ae_forward.1}
  #allocation0 [shape = 'u32[]', space=smem, size = 0x4, offset = 0x4, fixed_abs, tag = 'smem constant byte address 0x4 - core index']
  #allocation1 [shape = 'u32[144,128]{1,0:T(1,128)}', space=vmem, size = 0x12000, scoped, tag = 'internal scratch']
  %s0 = inlined_call_operand.vmem [shape: f32[10,32], index: 0, kind: input, shape index: {}]
  %s1 = inlined_call_operand.vmem [shape: s32[1,48], index: 1, kind: input, shape index: {}]
  %s2 = inlined_call_operand.vmem [shape: bf16[32,128], index: 2, kind: input, shape index: {}]
  %s3 = inlined_call_operand.vmem [shape: f32[1,128], index: 3, kind: input, shape index: {}]
  %s4 = inlined_call_operand.vmem [shape: bf16[128,128], index: 4, kind: input, shape index: {}]
  %s5 = inlined_call_operand.vmem [shape: f32[1,128], index: 5, kind: input, shape index: {}]
  %s6 = inlined_call_operand.vmem [shape: bf16[128,128], index: 6, kind: input, shape index: {}]
  %s7 = inlined_call_operand.vmem [shape: f32[1,128], index: 7, kind: input, shape index: {}]
  %s8 = inlined_call_operand.vmem [shape: bf16[128,48], index: 8, kind: input, shape index: {}]
  %s9 = inlined_call_operand.vmem [shape: f32[1,48], index: 9, kind: input, shape index: {}]
  %s10 = inlined_call_operand.vmem [shape: bf16[10,48], index: 10, kind: output, shape index: {}]
  %s11 = sld [smem:[#allocation0]]
  $region73: #{ae_forward.1} parent=0
    _
  %s13 = ssub.s32 1, %s11
  %s14 = scalar_select 0, %s13, %s11
  loop: start=0, step=1, limit=4
  $region2: #{ae_forward.1} parent=0 // loop_pre_header
    _
  $region3: #{ae_forward.1} parent=0 // loop_header
    %s16 = sphi 0, %s20
    %p17 = scmp.ge.s32.totalorder %s16, 4
    %s26 = sphi 0, %s28
    %s29 = sphi 0, %s26
    %s30 = sphi 0, %s29
    %s46 = sphi 0, %s30
    %s50 = sphi 0, %s50
    %s52 = sphi 0, %s50
    %s53 = sphi 0, %s52
    %s67 = sphi 0, %s53
    %s71 = sphi 0, %s71
    %s73 = sphi 0, %s71
    %s74 = sphi 0, %s73
    %s88 = sphi 0, %s74
    %s92 = sphi 0, %s92
    %s94 = sphi 0, %s92
    %s95 = sphi 0, %s94
    %s109 = sphi 0, %s95
    %s113 = sphi 0, %s113
    %s115 = sphi 0, %s113
    %s116 = sphi 0, %s115
    %s130 = sphi 0, %s116
    %s134 = sphi 0, %s134
    %s136 = sphi 0, %s134
    %s137 = sphi 0, %s136
    %s151 = sphi 0, %s137
    %s155 = sphi 0, %s155
    %s157 = sphi 0, %s155
    %s158 = sphi 0, %s157
    %s172 = sphi 0, %s158
    %s176 = sphi 0, %s176
    %s178 = sphi 0, %s176
    %s179 = sphi 0, %s178
    %s193 = sphi 0, %s179
    %s197 = sphi 0, %s197
    %s199 = sphi 0, %s197
    %s200 = sphi 0, %s199
    %s214 = sphi 0, %s200
    %s218 = sphi 0, %s218
    %s220 = sphi 0, %s218
    %s221 = sphi 0, %s220
    %s235 = sphi 0, %s221
    %s241 = sphi 0, %s243
    %s244 = sphi 0, %s241
    %s245 = sphi 0, %s244
    %s261 = sphi 0, %s245
  $region4: #{ae_forward.1} parent=0 // loop_header_branch
    %19 = sbr.rel (%p17) target = $region8
  $region5: #{ae_forward.1} parent=0 // loop_body
    %s21 = ssub.s32 %s16, 1
    %s22 = ssub.s32 %s16, 2
    %s23 = sadd.s32 %s16, 1
    %s24 = ssub.s32 %s16, %s23
    %p25 = scmp.eq.s32.totalorder %s24, 0
    %s27 = sadd.s32 %s26, 1
    %s28 = scalar_select %p25, %s26, %s27
    %p31 = pneg %p25
    %p32 = scmp.eq.s32.totalorder %s16, 1
    %p33 = por %p31, %p32
    %p34 = scmp.ne.s32.totalorder %s26, %s29
    %p35 = scmp.eq.s32.totalorder %s16, 0
    %p36 = por %p34, %p35
    %p37 = scmp.ne.s32.totalorder %s26, %s29
    %p38 = scmp.eq.s32.totalorder %s21, 1
    %p39 = por %p37, %p38
    %p40 = scmp.ne.s32.totalorder %s29, %s30
    %p41 = scmp.eq.s32.totalorder %s21, 0
    %p42 = por %p40, %p41
    %p43 = scmp.ne.s32.totalorder %s29, %s30
    %p44 = scmp.eq.s32.totalorder %s22, 1
    %p45 = por %p43, %p44
    %p47 = scmp.ne.s32.totalorder %s30, %s46
    %p48 = scmp.eq.s32.totalorder %s22, 0
    %p49 = por %p47, %p48
    %s51 = sadd.s32 %s50, 1
    %p54 = scmp.eq.s32.totalorder %s16, 1
    %p55 = scmp.ne.s32.totalorder %s50, %s52
    %p56 = scmp.eq.s32.totalorder %s16, 0
    %p57 = por %p55, %p56
    %p58 = scmp.ne.s32.totalorder %s50, %s52
    %p59 = scmp.eq.s32.totalorder %s21, 1
    %p60 = por %p58, %p59
    %p61 = scmp.ne.s32.totalorder %s52, %s53
    %p62 = scmp.eq.s32.totalorder %s21, 0
    %p63 = por %p61, %p62
    %p64 = scmp.ne.s32.totalorder %s52, %s53
    %p65 = scmp.eq.s32.totalorder %s22, 1
    %p66 = por %p64, %p65
    %p68 = scmp.ne.s32.totalorder %s53, %s67
    %p69 = scmp.eq.s32.totalorder %s22, 0
    %p70 = por %p68, %p69
    %s72 = sadd.s32 %s71, 1
    %p75 = scmp.eq.s32.totalorder %s16, 1
    %p76 = scmp.ne.s32.totalorder %s71, %s73
    %p77 = scmp.eq.s32.totalorder %s16, 0
    %p78 = por %p76, %p77
    %p79 = scmp.ne.s32.totalorder %s71, %s73
    %p80 = scmp.eq.s32.totalorder %s21, 1
    %p81 = por %p79, %p80
    %p82 = scmp.ne.s32.totalorder %s73, %s74
    %p83 = scmp.eq.s32.totalorder %s21, 0
    %p84 = por %p82, %p83
    %p85 = scmp.ne.s32.totalorder %s73, %s74
    %p86 = scmp.eq.s32.totalorder %s22, 1
    %p87 = por %p85, %p86
    %p89 = scmp.ne.s32.totalorder %s74, %s88
    %p90 = scmp.eq.s32.totalorder %s22, 0
    %p91 = por %p89, %p90
    %s93 = sadd.s32 %s92, 1
    %p96 = scmp.eq.s32.totalorder %s16, 1
    %p97 = scmp.ne.s32.totalorder %s92, %s94
    %p98 = scmp.eq.s32.totalorder %s16, 0
    %p99 = por %p97, %p98
    %p100 = scmp.ne.s32.totalorder %s92, %s94
    %p101 = scmp.eq.s32.totalorder %s21, 1
    %p102 = por %p100, %p101
    %p103 = scmp.ne.s32.totalorder %s94, %s95
    %p104 = scmp.eq.s32.totalorder %s21, 0
    %p105 = por %p103, %p104
    %p106 = scmp.ne.s32.totalorder %s94, %s95
    %p107 = scmp.eq.s32.totalorder %s22, 1
    %p108 = por %p106, %p107
    %p110 = scmp.ne.s32.totalorder %s95, %s109
    %p111 = scmp.eq.s32.totalorder %s22, 0
    %p112 = por %p110, %p111
    %s114 = sadd.s32 %s113, 1
    %p117 = scmp.eq.s32.totalorder %s16, 1
    %p118 = scmp.ne.s32.totalorder %s113, %s115
    %p119 = scmp.eq.s32.totalorder %s16, 0
    %p120 = por %p118, %p119
    %p121 = scmp.ne.s32.totalorder %s113, %s115
    %p122 = scmp.eq.s32.totalorder %s21, 1
    %p123 = por %p121, %p122
    %p124 = scmp.ne.s32.totalorder %s115, %s116
    %p125 = scmp.eq.s32.totalorder %s21, 0
    %p126 = por %p124, %p125
    %p127 = scmp.ne.s32.totalorder %s115, %s116
    %p128 = scmp.eq.s32.totalorder %s22, 1
    %p129 = por %p127, %p128
    %p131 = scmp.ne.s32.totalorder %s116, %s130
    %p132 = scmp.eq.s32.totalorder %s22, 0
    %p133 = por %p131, %p132
    %s135 = sadd.s32 %s134, 1
    %p138 = scmp.eq.s32.totalorder %s16, 1
    %p139 = scmp.ne.s32.totalorder %s134, %s136
    %p140 = scmp.eq.s32.totalorder %s16, 0
    %p141 = por %p139, %p140
    %p142 = scmp.ne.s32.totalorder %s134, %s136
    %p143 = scmp.eq.s32.totalorder %s21, 1
    %p144 = por %p142, %p143
    %p145 = scmp.ne.s32.totalorder %s136, %s137
    %p146 = scmp.eq.s32.totalorder %s21, 0
    %p147 = por %p145, %p146
    %p148 = scmp.ne.s32.totalorder %s136, %s137
    %p149 = scmp.eq.s32.totalorder %s22, 1
    %p150 = por %p148, %p149
    %p152 = scmp.ne.s32.totalorder %s137, %s151
    %p153 = scmp.eq.s32.totalorder %s22, 0
    %p154 = por %p152, %p153
    %s156 = sadd.s32 %s155, 1
    %p159 = scmp.eq.s32.totalorder %s16, 1
    %p160 = scmp.ne.s32.totalorder %s155, %s157
    %p161 = scmp.eq.s32.totalorder %s16, 0
    %p162 = por %p160, %p161
    %p163 = scmp.ne.s32.totalorder %s155, %s157
    %p164 = scmp.eq.s32.totalorder %s21, 1
    %p165 = por %p163, %p164
    %p166 = scmp.ne.s32.totalorder %s157, %s158
    %p167 = scmp.eq.s32.totalorder %s21, 0
    %p168 = por %p166, %p167
    %p169 = scmp.ne.s32.totalorder %s157, %s158
    %p170 = scmp.eq.s32.totalorder %s22, 1
    %p171 = por %p169, %p170
    %p173 = scmp.ne.s32.totalorder %s158, %s172
    %p174 = scmp.eq.s32.totalorder %s22, 0
    %p175 = por %p173, %p174
    %s177 = sadd.s32 %s176, 1
    %p180 = scmp.eq.s32.totalorder %s16, 1
    %p181 = scmp.ne.s32.totalorder %s176, %s178
    %p182 = scmp.eq.s32.totalorder %s16, 0
    %p183 = por %p181, %p182
    %p184 = scmp.ne.s32.totalorder %s176, %s178
    %p185 = scmp.eq.s32.totalorder %s21, 1
    %p186 = por %p184, %p185
    %p187 = scmp.ne.s32.totalorder %s178, %s179
    %p188 = scmp.eq.s32.totalorder %s21, 0
    %p189 = por %p187, %p188
    %p190 = scmp.ne.s32.totalorder %s178, %s179
    %p191 = scmp.eq.s32.totalorder %s22, 1
    %p192 = por %p190, %p191
    %p194 = scmp.ne.s32.totalorder %s179, %s193
    %p195 = scmp.eq.s32.totalorder %s22, 0
    %p196 = por %p194, %p195
    %s198 = sadd.s32 %s197, 1
    %p201 = scmp.eq.s32.totalorder %s16, 1
    %p202 = scmp.ne.s32.totalorder %s197, %s199
    %p203 = scmp.eq.s32.totalorder %s16, 0
    %p204 = por %p202, %p203
    %p205 = scmp.ne.s32.totalorder %s197, %s199
    %p206 = scmp.eq.s32.totalorder %s21, 1
    %p207 = por %p205, %p206
    %p208 = scmp.ne.s32.totalorder %s199, %s200
    %p209 = scmp.eq.s32.totalorder %s21, 0
    %p210 = por %p208, %p209
    %p211 = scmp.ne.s32.totalorder %s199, %s200
    %p212 = scmp.eq.s32.totalorder %s22, 1
    %p213 = por %p211, %p212
    %p215 = scmp.ne.s32.totalorder %s200, %s214
    %p216 = scmp.eq.s32.totalorder %s22, 0
    %p217 = por %p215, %p216
    %s219 = sadd.s32 %s218, 1
    %p222 = scmp.eq.s32.totalorder %s16, 1
    %p223 = scmp.ne.s32.totalorder %s218, %s220
    %p224 = scmp.eq.s32.totalorder %s16, 0
    %p225 = por %p223, %p224
    %p226 = scmp.ne.s32.totalorder %s218, %s220
    %p227 = scmp.eq.s32.totalorder %s21, 1
    %p228 = por %p226, %p227
    %p229 = scmp.ne.s32.totalorder %s220, %s221
    %p230 = scmp.eq.s32.totalorder %s21, 0
    %p231 = por %p229, %p230
    %p232 = scmp.ne.s32.totalorder %s220, %s221
    %p233 = scmp.eq.s32.totalorder %s22, 1
    %p234 = por %p232, %p233
    %p236 = scmp.ne.s32.totalorder %s221, %s235
    %p237 = scmp.eq.s32.totalorder %s22, 0
    %p238 = por %p236, %p237
    %s239 = ssub.s32 %s16, %s23
    %p240 = scmp.eq.s32.totalorder %s239, 0
    %s242 = sadd.s32 %s241, 1
    %s243 = scalar_select %p240, %s241, %s242
    %p246 = pneg %p240
    %p247 = scmp.eq.s32.totalorder %s16, 1
    %p248 = por %p246, %p247
    %p249 = scmp.ne.s32.totalorder %s241, %s244
    %p250 = scmp.eq.s32.totalorder %s16, 0
    %p251 = por %p249, %p250
    %p252 = scmp.ne.s32.totalorder %s241, %s244
    %p253 = scmp.eq.s32.totalorder %s21, 1
    %p254 = por %p252, %p253
    %p255 = scmp.ne.s32.totalorder %s244, %s245
    %p256 = scmp.eq.s32.totalorder %s21, 0
    %p257 = por %p255, %p256
    %p258 = scmp.ne.s32.totalorder %s244, %s245
    %p259 = scmp.eq.s32.totalorder %s22, 1
    %p260 = por %p258, %p259
    %p262 = scmp.ne.s32.totalorder %s245, %s261
    %p263 = scmp.eq.s32.totalorder %s22, 0
    %p264 = por %p262, %p263
    %p265 = scmp.le.s32.totalorder 1, %s16
    %p266 = scmp.lt.s32.totalorder %s16, 3
    %p267 = pnand %p265, %p266
    %p268 = pneg %p267
    // Predicated region
    $region9: #{ae_forward.1} parent=5 // pred_check
      _
    $region10: #{ae_forward.1} parent=5 // pred_check_branch
      %270 = sbr.rel (%p267) target = $region12
    $region11: #{ae_forward.1} parent=5 // pred_region
      %s271 = ssub.s32 %s16, 1
      // Predicated region
      $region13: #{ae_forward.1} parent=11 // pred_check
        %p272 = pneg %p63
      $region14: #{ae_forward.1} parent=11 // pred_check_branch
        %274 = sbr.rel (%p272) target = $region16
      $region15: #{ae_forward.1} parent=11 // pred_region
        _
      $region16: #{ae_forward.1} parent=11 // pred_fallthru
        _
      // Predicated region
      $region17: #{ae_forward.1} parent=11 // pred_check
        %p275 = pneg %p84
      $region18: #{ae_forward.1} parent=11 // pred_check_branch
        %277 = sbr.rel (%p275) target = $region20
      $region19: #{ae_forward.1} parent=11 // pred_region
        _
      $region20: #{ae_forward.1} parent=11 // pred_fallthru
        _
      // Predicated region
      $region21: #{ae_forward.1} parent=11 // pred_check
        %p278 = pneg %p105
      $region22: #{ae_forward.1} parent=11 // pred_check_branch
        %280 = sbr.rel (%p278) target = $region24
      $region23: #{ae_forward.1} parent=11 // pred_region
        _
      $region24: #{ae_forward.1} parent=11 // pred_fallthru
        _
      // Predicated region
      $region25: #{ae_forward.1} parent=11 // pred_check
        %p281 = pneg %p126
      $region26: #{ae_forward.1} parent=11 // pred_check_branch
        %283 = sbr.rel (%p281) target = $region28
      $region27: #{ae_forward.1} parent=11 // pred_region
        _
      $region28: #{ae_forward.1} parent=11 // pred_fallthru
        _
      // Predicated region
      $region29: #{ae_forward.1} parent=11 // pred_check
        %p284 = pneg %p147
      $region30: #{ae_forward.1} parent=11 // pred_check_branch
        %286 = sbr.rel (%p284) target = $region32
      $region31: #{ae_forward.1} parent=11 // pred_region
        _
      $region32: #{ae_forward.1} parent=11 // pred_fallthru
        _
      // Predicated region
      $region33: #{ae_forward.1} parent=11 // pred_check
        %p287 = pneg %p168
      $region34: #{ae_forward.1} parent=11 // pred_check_branch
        %289 = sbr.rel (%p287) target = $region36
      $region35: #{ae_forward.1} parent=11 // pred_region
        _
      $region36: #{ae_forward.1} parent=11 // pred_fallthru
        _
      // Predicated region
      $region37: #{ae_forward.1} parent=11 // pred_check
        %p290 = pneg %p189
      $region38: #{ae_forward.1} parent=11 // pred_check_branch
        %292 = sbr.rel (%p290) target = $region40
      $region39: #{ae_forward.1} parent=11 // pred_region
        _
      $region40: #{ae_forward.1} parent=11 // pred_fallthru
        _
      // Predicated region
      $region41: #{ae_forward.1} parent=11 // pred_check
        %p293 = pneg %p210
      $region42: #{ae_forward.1} parent=11 // pred_check_branch
        %295 = sbr.rel (%p293) target = $region44
      $region43: #{ae_forward.1} parent=11 // pred_region
        _
      $region44: #{ae_forward.1} parent=11 // pred_fallthru
        _
      // Predicated region
      $region45: #{ae_forward.1} parent=11 // pred_check
        %p296 = pneg %p231
      $region46: #{ae_forward.1} parent=11 // pred_check_branch
        %298 = sbr.rel (%p296) target = $region48
      $region47: #{ae_forward.1} parent=11 // pred_region
        _
      $region48: #{ae_forward.1} parent=11 // pred_fallthru
        _
    $region12: #{ae_forward.1} parent=5 // pred_fallthru
      _
    %p299 = scmp.lt.s32.totalorder %s16, 2
    // Predicated region
    $region49: #{ae_forward.1} parent=5 // pred_check
      %p300 = pneg %p299
    $region50: #{ae_forward.1} parent=5 // pred_check_branch
      %302 = sbr.rel (%p300) target = $region52
    $region51: #{ae_forward.1} parent=5 // pred_region
      // Predicated region
      $region53: #{ae_forward.1} parent=51 // pred_check
        %p303 = pneg %p36
      $region54: #{ae_forward.1} parent=51 // pred_check_branch
        %305 = sbr.rel (%p303) target = $region56
      $region55: #{ae_forward.1} parent=51 // pred_region
        %p306 = scmp.lt.s32.totalorder %s16, 1
        %s307 = scalar_select %p306, %s16, 1
        %s308 = smul.addr %s307, 8
        %s309 = scalar_lea.vmem %s0, %s308
      $region56: #{ae_forward.1} parent=51 // pred_fallthru
        _
    $region52: #{ae_forward.1} parent=5 // pred_fallthru
      _
    %p310 = scmp.le.s32.totalorder 1, %s16
    %p311 = scmp.lt.s32.totalorder %s16, 3
    %p312 = pnand %p310, %p311
    %p313 = pneg %p312
    // Predicated region
    $region57: #{ae_forward.1} parent=5 // pred_check
      _
    $region58: #{ae_forward.1} parent=5 // pred_check_branch
      %315 = sbr.rel (%p312) target = $region60
    $region59: #{ae_forward.1} parent=5 // pred_region
      %s316 = ssub.s32 %s16, 1
      %p317 = scmp.lt.s32.totalorder %s21, 1
      %s318 = scalar_select %p317, %s21, 1
      %s319 = smul.addr %s318, 8
      %s320 = scalar_lea.vmem %s0, %s319
      %p321 = pneg %p42
      %p322 = pneg %p39
      %p323 = pneg %p63
      %p324 = pneg %p60
      %p325 = pneg %p84
      %p326 = pneg %p81
      %p327 = pneg %p105
      %p328 = pneg %p102
      %p329 = pneg %p126
      %p330 = pneg %p123
      %p331 = pneg %p147
      %p332 = pneg %p144
      %p333 = pneg %p168
      %p334 = pneg %p165
      %p335 = pneg %p189
      %p336 = pneg %p186
      %p337 = pneg %p210
      %p338 = pneg %p207
      %p339 = pneg %p231
      %p340 = pneg %p228
      %p341 = pneg %p257
      %p342 = pneg %p254
      %p343 = scmp.lt.s32.totalorder %s21, 1
      %s344 = scalar_select %p343, %s21, 1
      %s345 = smul.addr %s344, 4
      %s346 = scalar_lea.vmem %s10, %s345
      %p347 = scmp.lt.s32.totalorder %s21, 1
      %s348 = scalar_select %p347, %s21, 1
      %s349 = smul.addr %s348, 8
      %s350 = scalar_lea.vmem %s0, %s349
      %p351 = scmp.lt.s32.totalorder %s21, 1
      %s352 = scalar_select %p351, %s21, 1
      %s353 = smul.addr %s352, 4
      %s354 = scalar_lea.vmem %s10, %s353
      %v356 = vld [vmem:[%s350] sm:$0xff]
      %v357 = vpack.c.bf16 %v356, %v356
      %v358 = vld [vmem:[%s2] sm:$0xf]
      %v359 = vld [vmem:[%s2 + $0x4] sm:$0xf]
      %v360 = vld [vmem:[%s2 + $0x8] sm:$0xf]
      %v361 = vld [vmem:[%s2 + $0xc] sm:$0xf]
      %v362 = vld [vmem:[%s3] sm:$0x1]
      %v364 = vlaneseq
      %v365 = vshrl.u32 %v364, 7
      %v366 = vsub.s32 0, %v365
      %v367 = vrot.slane %v362, %v366
      %v373 = vunpack.c.l.b16 %v358
      %v374 = vunpack.c.l.b16 %v359
      %v375 = vunpack.c.l.b16 %v360
      %v376 = vunpack.c.l.b16 %v361
      %v377 = vpack.c.b16 %v374, %v373
      %v378 = vpack.c.b16 %v376, %v375
      %vm381 = vcmask 261120
      %v383 = vsel %vm381, %v357, 0
      %385 = vmatprep.subr.bf16.mxu0 0
      %386 = vmatpush1.bf16.msra.mxu0 %v377
      %387 = vmatprep.subr.bf16.mxu0 0
      %388 = vmatpush1.bf16.msra.mxu0 %v378
      %389 = vmatprep.subr.bf16.mxu0 0
      %390 = vmatpush1.bf16.msra.mxu0 0
      %391 = vmatprep.subr.bf16.mxu0 0
      %392 = vmatpush1.bf16.msra.mxu0 0
      %393 = vmatprep.subr.bf16.mxu0 0
      %394 = vmatpush1.bf16.msra.mxu0 0
      %395 = vmatprep.subr.bf16.mxu0 0
      %396 = vmatpush1.bf16.msra.mxu0 0
      %397 = vmatprep.subr.bf16.mxu0 0
      %398 = vmatpush1.bf16.msra.mxu0 0
      %399 = vmatprep.subr.bf16.mxu0 0
      %400 = vmatpush1.bf16.msra.mxu0 0
      %401 = vmatprep.subr.bf16.mxu0 0
      %402 = vmatpush1.bf16.msra.mxu0 0
      %403 = vmatprep.subr.bf16.mxu0 0
      %404 = vmatpush1.bf16.msra.mxu0 0
      %405 = vmatprep.subr.bf16.mxu0 0
      %406 = vmatpush1.bf16.msra.mxu0 0
      %407 = vmatprep.subr.bf16.mxu0 0
      %408 = vmatpush1.bf16.msra.mxu0 0
      %409 = vmatprep.subr.bf16.mxu0 0
      %410 = vmatpush1.bf16.msra.mxu0 0
      %411 = vmatprep.subr.bf16.mxu0 0
      %412 = vmatpush1.bf16.msra.mxu0 0
      %413 = vmatprep.subr.bf16.mxu0 0
      %414 = vmatpush1.bf16.msra.mxu0 0
      %415 = vmatprep.subr.bf16.mxu0 0
      %416 = vmatpush1.bf16.msra.mxu0 0
      %417 = vmatprep.mubr.bf16.mxu0 0
      %418 = vmatmul.mubr.bf16.gmra.mrb[0].mxu0 %v383
      %v419 = vpop.f32.mrb[0].mxu0
      %v420 = vadd.f32 %v367, %v419
      %v421 = vpop.f32.mrb[0].mxu0
      %v422 = vpop.f32.mrb[0].mxu0
      %v423 = vpop.f32.mrb[0].mxu0
      %424 = vdwg.mxu0
      %v425 = vmax.f32 %v420, 0.0
      %v426 = vpack.c.bf16 %v425, %v425
      %v427 = vld [vmem:[%s4] sm:$0xf]
      %v428 = vld [vmem:[%s4 + $0x4] sm:$0xf]
      %v429 = vld [vmem:[%s4 + $0x8] sm:$0xf]
      %v430 = vld [vmem:[%s4 + $0xc] sm:$0xf]
      %v431 = vld [vmem:[%s4 + $0x10] sm:$0xf]
      %v432 = vld [vmem:[%s4 + $0x14] sm:$0xf]
      %v433 = vld [vmem:[%s4 + $0x18] sm:$0xf]
      %v434 = vld [vmem:[%s4 + $0x1c] sm:$0xf]
      %v435 = vld [vmem:[%s4 + $0x20] sm:$0xf]
      %v436 = vld [vmem:[%s4 + $0x24] sm:$0xf]
      %v437 = vld [vmem:[%s4 + $0x28] sm:$0xf]
      %v438 = vld [vmem:[%s4 + $0x2c] sm:$0xf]
      %v439 = vld [vmem:[%s4 + $0x30] sm:$0xf]
      %v440 = vld [vmem:[%s4 + $0x34] sm:$0xf]
      %v441 = vld [vmem:[%s4 + $0x38] sm:$0xf]
      %v442 = vld [vmem:[%s4 + $0x3c] sm:$0xf]
      %v443 = vld [vmem:[%s5] sm:$0x1]
      %v445 = vlaneseq
      %v446 = vshrl.u32 %v445, 7
      %v447 = vsub.s32 0, %v446
      %v448 = vrot.slane %v443, %v447
      %v466 = vunpack.c.l.b16 %v427
      %v467 = vunpack.c.l.b16 %v428
      %v468 = vunpack.c.l.b16 %v429
      %v469 = vunpack.c.l.b16 %v430
      %v470 = vunpack.c.l.b16 %v431
      %v471 = vunpack.c.l.b16 %v432
      %v472 = vunpack.c.l.b16 %v433
      %v473 = vunpack.c.l.b16 %v434
      %v474 = vunpack.c.l.b16 %v435
      %v475 = vunpack.c.l.b16 %v436
      %v476 = vunpack.c.l.b16 %v437
      %v477 = vunpack.c.l.b16 %v438
      %v478 = vunpack.c.l.b16 %v439
      %v479 = vunpack.c.l.b16 %v440
      %v480 = vunpack.c.l.b16 %v441
      %v481 = vunpack.c.l.b16 %v442
      %v482 = vpack.c.b16 %v467, %v466
      %v483 = vpack.c.b16 %v469, %v468
      %v484 = vpack.c.b16 %v471, %v470
      %v485 = vpack.c.b16 %v473, %v472
      %v486 = vpack.c.b16 %v475, %v474
      %v487 = vpack.c.b16 %v477, %v476
      %v488 = vpack.c.b16 %v479, %v478
      %v489 = vpack.c.b16 %v481, %v480
      %498 = vmatprep.subr.bf16.mxu0 0
      %499 = vmatpush1.bf16.msra.mxu0 %v482
      %500 = vmatprep.subr.bf16.mxu0 0
      %501 = vmatpush1.bf16.msra.mxu0 %v483
      %502 = vmatprep.subr.bf16.mxu0 0
      %503 = vmatpush1.bf16.msra.mxu0 %v484
      %504 = vmatprep.subr.bf16.mxu0 0
      %505 = vmatpush1.bf16.msra.mxu0 %v485
      %506 = vmatprep.subr.bf16.mxu0 0
      %507 = vmatpush1.bf16.msra.mxu0 %v486
      %508 = vmatprep.subr.bf16.mxu0 0
      %509 = vmatpush1.bf16.msra.mxu0 %v487
      %510 = vmatprep.subr.bf16.mxu0 0
      %511 = vmatpush1.bf16.msra.mxu0 %v488
      %512 = vmatprep.subr.bf16.mxu0 0
      %513 = vmatpush1.bf16.msra.mxu0 %v489
      %514 = vmatprep.subr.bf16.mxu0 0
      %515 = vmatpush1.bf16.msra.mxu0 0
      %516 = vmatprep.subr.bf16.mxu0 0
      %517 = vmatpush1.bf16.msra.mxu0 0
      %518 = vmatprep.subr.bf16.mxu0 0
      %519 = vmatpush1.bf16.msra.mxu0 0
      %520 = vmatprep.subr.bf16.mxu0 0
      %521 = vmatpush1.bf16.msra.mxu0 0
      %522 = vmatprep.subr.bf16.mxu0 0
      %523 = vmatpush1.bf16.msra.mxu0 0
      %524 = vmatprep.subr.bf16.mxu0 0
      %525 = vmatpush1.bf16.msra.mxu0 0
      %526 = vmatprep.subr.bf16.mxu0 0
      %527 = vmatpush1.bf16.msra.mxu0 0
      %528 = vmatprep.subr.bf16.mxu0 0
      %529 = vmatpush1.bf16.msra.mxu0 0
      %530 = vmatprep.mubr.bf16.mxu0 0
      %531 = vmatmul.mubr.bf16.gmra.mrb[0].mxu0 %v426
      %v532 = vpop.f32.mrb[0].mxu0
      %v533 = vadd.f32 %v448, %v532
      %v534 = vpop.f32.mrb[0].mxu0
      %v535 = vpop.f32.mrb[0].mxu0
      %v536 = vpop.f32.mrb[0].mxu0
      %537 = vdwg.mxu0
      %v538 = vmax.f32 %v533, 0.0
      %v539 = vpack.c.bf16 %v538, %v538
      %v540 = vld [vmem:[%s6] sm:$0xf]
      %v541 = vld [vmem:[%s6 + $0x4] sm:$0xf]
      %v542 = vld [vmem:[%s6 + $0x8] sm:$0xf]
      %v543 = vld [vmem:[%s6 + $0xc] sm:$0xf]
      %v544 = vld [vmem:[%s6 + $0x10] sm:$0xf]
      %v545 = vld [vmem:[%s6 + $0x14] sm:$0xf]
      %v546 = vld [vmem:[%s6 + $0x18] sm:$0xf]
      %v547 = vld [vmem:[%s6 + $0x1c] sm:$0xf]
      %v548 = vld [vmem:[%s6 + $0x20] sm:$0xf]
      %v549 = vld [vmem:[%s6 + $0x24] sm:$0xf]
      %v550 = vld [vmem:[%s6 + $0x28] sm:$0xf]
      %v551 = vld [vmem:[%s6 + $0x2c] sm:$0xf]
      %v552 = vld [vmem:[%s6 + $0x30] sm:$0xf]
      %v553 = vld [vmem:[%s6 + $0x34] sm:$0xf]
      %v554 = vld [vmem:[%s6 + $0x38] sm:$0xf]
      %v555 = vld [vmem:[%s6 + $0x3c] sm:$0xf]
      %v556 = vld [vmem:[%s7] sm:$0x1]
      %v558 = vlaneseq
      %v559 = vshrl.u32 %v558, 7
      %v560 = vsub.s32 0, %v559
      %v561 = vrot.slane %v556, %v560
      %v579 = vunpack.c.l.b16 %v540
      %v580 = vunpack.c.l.b16 %v541
      %v581 = vunpack.c.l.b16 %v542
      %v582 = vunpack.c.l.b16 %v543
      %v583 = vunpack.c.l.b16 %v544
      %v584 = vunpack.c.l.b16 %v545
      %v585 = vunpack.c.l.b16 %v546
      %v586 = vunpack.c.l.b16 %v547
      %v587 = vunpack.c.l.b16 %v548
      %v588 = vunpack.c.l.b16 %v549
      %v589 = vunpack.c.l.b16 %v550
      %v590 = vunpack.c.l.b16 %v551
      %v591 = vunpack.c.l.b16 %v552
      %v592 = vunpack.c.l.b16 %v553
      %v593 = vunpack.c.l.b16 %v554
      %v594 = vunpack.c.l.b16 %v555
      %v595 = vpack.c.b16 %v580, %v579
      %v596 = vpack.c.b16 %v582, %v581
      %v597 = vpack.c.b16 %v584, %v583
      %v598 = vpack.c.b16 %v586, %v585
      %v599 = vpack.c.b16 %v588, %v587
      %v600 = vpack.c.b16 %v590, %v589
      %v601 = vpack.c.b16 %v592, %v591
      %v602 = vpack.c.b16 %v594, %v593
      %611 = vmatprep.subr.bf16.mxu0 0
      %612 = vmatpush1.bf16.msra.mxu0 %v595
      %613 = vmatprep.subr.bf16.mxu0 0
      %614 = vmatpush1.bf16.msra.mxu0 %v596
      %615 = vmatprep.subr.bf16.mxu0 0
      %616 = vmatpush1.bf16.msra.mxu0 %v597
      %617 = vmatprep.subr.bf16.mxu0 0
      %618 = vmatpush1.bf16.msra.mxu0 %v598
      %619 = vmatprep.subr.bf16.mxu0 0
      %620 = vmatpush1.bf16.msra.mxu0 %v599
      %621 = vmatprep.subr.bf16.mxu0 0
      %622 = vmatpush1.bf16.msra.mxu0 %v600
      %623 = vmatprep.subr.bf16.mxu0 0
      %624 = vmatpush1.bf16.msra.mxu0 %v601
      %625 = vmatprep.subr.bf16.mxu0 0
      %626 = vmatpush1.bf16.msra.mxu0 %v602
      %627 = vmatprep.subr.bf16.mxu0 0
      %628 = vmatpush1.bf16.msra.mxu0 0
      %629 = vmatprep.subr.bf16.mxu0 0
      %630 = vmatpush1.bf16.msra.mxu0 0
      %631 = vmatprep.subr.bf16.mxu0 0
      %632 = vmatpush1.bf16.msra.mxu0 0
      %633 = vmatprep.subr.bf16.mxu0 0
      %634 = vmatpush1.bf16.msra.mxu0 0
      %635 = vmatprep.subr.bf16.mxu0 0
      %636 = vmatpush1.bf16.msra.mxu0 0
      %637 = vmatprep.subr.bf16.mxu0 0
      %638 = vmatpush1.bf16.msra.mxu0 0
      %639 = vmatprep.subr.bf16.mxu0 0
      %640 = vmatpush1.bf16.msra.mxu0 0
      %641 = vmatprep.subr.bf16.mxu0 0
      %642 = vmatpush1.bf16.msra.mxu0 0
      %643 = vmatprep.mubr.bf16.mxu0 0
      %644 = vmatmul.mubr.bf16.gmra.mrb[0].mxu0 %v539
      %v645 = vpop.f32.mrb[0].mxu0
      %v646 = vadd.f32 %v561, %v645
      %v647 = vpop.f32.mrb[0].mxu0
      %v648 = vpop.f32.mrb[0].mxu0
      %v649 = vpop.f32.mrb[0].mxu0
      %650 = vdwg.mxu0
      %v651 = vmax.f32 %v646, 0.0
      %v652 = vpack.c.bf16 %v651, %v651
      %v653 = vld [vmem:[%s8] sm:$0xf]
      %v654 = vld [vmem:[%s8 + $0x4] sm:$0xf]
      %v655 = vld [vmem:[%s8 + $0x8] sm:$0xf]
      %v656 = vld [vmem:[%s8 + $0xc] sm:$0xf]
      %v657 = vld [vmem:[%s8 + $0x10] sm:$0xf]
      %v658 = vld [vmem:[%s8 + $0x14] sm:$0xf]
      %v659 = vld [vmem:[%s8 + $0x18] sm:$0xf]
      %v660 = vld [vmem:[%s8 + $0x1c] sm:$0xf]
      %v661 = vld [vmem:[%s8 + $0x20] sm:$0xf]
      %v662 = vld [vmem:[%s8 + $0x24] sm:$0xf]
      %v663 = vld [vmem:[%s8 + $0x28] sm:$0xf]
      %v664 = vld [vmem:[%s8 + $0x2c] sm:$0xf]
      %v665 = vld [vmem:[%s8 + $0x30] sm:$0xf]
      %v666 = vld [vmem:[%s8 + $0x34] sm:$0xf]
      %v667 = vld [vmem:[%s8 + $0x38] sm:$0xf]
      %v668 = vld [vmem:[%s8 + $0x3c] sm:$0xf]
      %v669 = vld [vmem:[%s9] sm:$0x1]
      %v671 = vlaneseq
      %v672 = vshrl.u32 %v671, 7
      %v673 = vsub.s32 0, %v672
      %v674 = vrot.slane %v669, %v673
      %v692 = vunpack.c.l.b16 %v653
      %v693 = vunpack.c.l.b16 %v654
      %v694 = vunpack.c.l.b16 %v655
      %v695 = vunpack.c.l.b16 %v656
      %v696 = vunpack.c.l.b16 %v657
      %v697 = vunpack.c.l.b16 %v658
      %v698 = vunpack.c.l.b16 %v659
      %v699 = vunpack.c.l.b16 %v660
      %v700 = vunpack.c.l.b16 %v661
      %v701 = vunpack.c.l.b16 %v662
      %v702 = vunpack.c.l.b16 %v663
      %v703 = vunpack.c.l.b16 %v664
      %v704 = vunpack.c.l.b16 %v665
      %v705 = vunpack.c.l.b16 %v666
      %v706 = vunpack.c.l.b16 %v667
      %v707 = vunpack.c.l.b16 %v668
      %v708 = vpack.c.b16 %v693, %v692
      %v709 = vpack.c.b16 %v695, %v694
      %v710 = vpack.c.b16 %v697, %v696
      %v711 = vpack.c.b16 %v699, %v698
      %v712 = vpack.c.b16 %v701, %v700
      %v713 = vpack.c.b16 %v703, %v702
      %v714 = vpack.c.b16 %v705, %v704
      %v715 = vpack.c.b16 %v707, %v706
      %724 = vmatprep.subr.bf16.mxu0 0
      %725 = vmatpush1.bf16.msra.mxu0 %v708
      %726 = vmatprep.subr.bf16.mxu0 0
      %727 = vmatpush1.bf16.msra.mxu0 %v709
      %728 = vmatprep.subr.bf16.mxu0 0
      %729 = vmatpush1.bf16.msra.mxu0 %v710
      %730 = vmatprep.subr.bf16.mxu0 0
      %731 = vmatpush1.bf16.msra.mxu0 %v711
      %732 = vmatprep.subr.bf16.mxu0 0
      %733 = vmatpush1.bf16.msra.mxu0 %v712
      %734 = vmatprep.subr.bf16.mxu0 0
      %735 = vmatpush1.bf16.msra.mxu0 %v713
      %736 = vmatprep.subr.bf16.mxu0 0
      %737 = vmatpush1.bf16.msra.mxu0 %v714
      %738 = vmatprep.subr.bf16.mxu0 0
      %739 = vmatpush1.bf16.msra.mxu0 %v715
      %740 = vmatprep.subr.bf16.mxu0 0
      %741 = vmatpush1.bf16.msra.mxu0 0
      %742 = vmatprep.subr.bf16.mxu0 0
      %743 = vmatpush1.bf16.msra.mxu0 0
      %744 = vmatprep.subr.bf16.mxu0 0
      %745 = vmatpush1.bf16.msra.mxu0 0
      %746 = vmatprep.subr.bf16.mxu0 0
      %747 = vmatpush1.bf16.msra.mxu0 0
      %748 = vmatprep.subr.bf16.mxu0 0
      %749 = vmatpush1.bf16.msra.mxu0 0
      %750 = vmatprep.subr.bf16.mxu0 0
      %751 = vmatpush1.bf16.msra.mxu0 0
      %752 = vmatprep.subr.bf16.mxu0 0
      %753 = vmatpush1.bf16.msra.mxu0 0
      %754 = vmatprep.subr.bf16.mxu0 0
      %755 = vmatpush1.bf16.msra.mxu0 0
      %756 = vmatprep.mubr.bf16.mxu0 0
      %757 = vmatmul.mubr.bf16.gmra.mrb[0].mxu0 %v652
      %v758 = vpop.f32.mrb[0].mxu0
      %v759 = vadd.f32 %v674, %v758
      %v760 = vpop.f32.mrb[0].mxu0
      %v761 = vpop.f32.mrb[0].mxu0
      %v762 = vpop.f32.mrb[0].mxu0
      %763 = vdwg.mxu0
      %v764 = vmul.f32 %v759, 0.5
      %v765 = vtanh.pop %v764
      %v766 = vmul.f32 %v765, 0.5
      %v767 = vadd.f32 %v766, 0.5
      %v768 = vld [vmem:[%s1] sm:$0x1]
      %vm769 = vcmp.ne.s32.totalorder %v768, 0
      %v770 = vsel %vm769, 1, 0
      %v771 = vlaneseq
      %v772 = vshrl.u32 %v771, 7
      %v773 = vsub.s32 0, %v772
      %v774 = vrot.slane %v770, %v773
      %vm775 = vcmp.eq.s32.totalorder %v774, 1
      %v776 = vsel %vm775, %v767, %v759
      %v777 = vpack.c.bf16 %v776, %v776
      %vm778 = vcmask 388096
      %779 = vst.msk [vmem:[%s354] sm:$0xf] %vm778, %v777
      %p780 = scmp.lt.s32.totalorder %s21, 1
      %s781 = scalar_select %p780, %s21, 1
      %s782 = smul.addr %s781, 4
      %s783 = scalar_lea.vmem %s10, %s782
      // Predicated region
      $region61: #{ae_forward.1} parent=59 // pred_check
        %p784 = pneg %p254
      $region62: #{ae_forward.1} parent=59 // pred_check_branch
        %786 = sbr.rel (%p784) target = $region64
      $region63: #{ae_forward.1} parent=59 // pred_region
        _
      $region64: #{ae_forward.1} parent=59 // pred_fallthru
        _
    $region60: #{ae_forward.1} parent=5 // pred_fallthru
      _
    %p787 = scmp.le.s32.totalorder 2, %s16
    // Predicated region
    $region65: #{ae_forward.1} parent=5 // pred_check
      %p788 = pneg %p787
    $region66: #{ae_forward.1} parent=5 // pred_check_branch
      %790 = sbr.rel (%p788) target = $region68
    $region67: #{ae_forward.1} parent=5 // pred_region
      %s791 = ssub.s32 %s16, 2
      // Predicated region
      $region69: #{ae_forward.1} parent=67 // pred_check
        %p792 = pneg %p260
      $region70: #{ae_forward.1} parent=67 // pred_check_branch
        %794 = sbr.rel (%p792) target = $region72
      $region71: #{ae_forward.1} parent=67 // pred_region
        %p795 = scmp.lt.s32.totalorder %s22, 1
        %s796 = scalar_select %p795, %s22, 1
        %s797 = smul.addr %s796, 4
        %s798 = scalar_lea.vmem %s10, %s797
      $region72: #{ae_forward.1} parent=67 // pred_fallthru
        _
    $region68: #{ae_forward.1} parent=5 // pred_fallthru
      _
  $region6: #{ae_forward.1} parent=0 // loop_footer
    %s20 = sadd.s32 1, %s16
  $region7: #{ae_forward.1} parent=0 // loop_footer_branch
    %15 = sbr.rel target = $region3
  $region8: #{ae_forward.1} parent=0 // loop_exit
    _

</llo_original>
